<compile_context>
chip_gen: v6e
topology: v6e:2x2x1
jax: 0.10.0
libtpu: 0.0.40
codegen_flags: <defaults>
</compile_context>

<pallas_src>
import functools

import jax
import jax.numpy as jnp
from jax.experimental import pallas as pl
from jax.experimental.pallas import tpu as pltpu


def _ntxent_time_kernel(zis_ref, zjst_ref, keep_ref, pos_ref, out_ref, neg_sc,
                        *, shift):
    """One (row-block, col-block) step of the streamed NT-Xent reduction."""
    j = pl.program_id(1)
    shift_f = jnp.float32(shift)

    @pl.when(j == 0)
    def _init():
        neg_sc[...] = jnp.zeros_like(neg_sc)

    # zis rows already L2-normalized and pre-scaled by 1/T; zjs pre-normalized
    # and pre-transposed -> plain (tb_r, Dp) @ (Dp, tb_c) bf16 MXU matmul.
    sim = jnp.dot(zis_ref[...], zjst_ref[...],
                  preferred_element_type=jnp.float32)          # (tb_r, tb_c) f32

    # keep = 1 - eye - mask (precomputed, bf16, zero on padded rows/cols).
    neg_sc[...] += jnp.sum(jnp.exp(sim - shift_f) * keep_ref[...].astype(jnp.float32),
                           axis=-1, keepdims=True)

    @pl.when(j == pl.num_programs(1) - 1)
    def _fin():
        pos = pos_ref[...]                                     # (tb_r, 1) f32, /T
        # loss = -log(exp(pos)/(exp(pos)+neg)) = log(exp(pos-s)+neg_s) + s - pos
        out_ref[...] = jnp.log(jnp.exp(pos - shift_f) + neg_sc[...]) + shift_f - pos


def _round_up(x, q):
    return ((x + q - 1) // q) * q


def _choose_tiling(B):
    """Pick (tb_r, tb_c, Bp): lane-aligned column tile, >=2 row blocks."""
    # Column tile: lane axis of sim/keep -> multiple of 128, capped at 512.
    tb_c = 128 if B <= 128 else (256 if B <= 1024 else 512)
    Bp = _round_up(max(B, 2), tb_c)
    # Row tile: multiple of 16 (bf16 sublane packing) dividing Bp, capped at
    # 256 (keeps flops/byte high on v5e) and at Bp//2 so the "parallel" row
    # axis always has >= 2 blocks for v7x megacore.
    tb_r = 16
    for cand in (256, 128, 64, 32, 16):
        if cand <= Bp // 2 and Bp % cand == 0:
            tb_r = cand
            break
    return tb_r, tb_c, Bp


def _l2_normalize(x):
    # Matches F.normalize(p=2, dim=-1) with eps=1e-12 clamp.
    return x * jax.lax.rsqrt(
        jnp.maximum(jnp.sum(x * x, axis=-1, keepdims=True), jnp.float32(1e-24)))


def ntxent_loss_time(zis, zjs, mask, k, *, temperature):
    """Pallas implementation of NTXentLoss_time.forward.

    `k` only affects the torch-side reshape bookkeeping (number of masked
    negatives per row), not the math, so it is accepted for signature parity
    but unused.
    """
    del k
    B = zis.shape[0]
    inv_t = 1.0 / float(temperature)

    zis_f = zis.reshape(B, -1).astype(jnp.float32)
    zjs_f = zjs.reshape(B, -1).astype(jnp.float32)
    D = zis_f.shape[1]

    # --- O(B*D) preprocessing in plain XLA -----------------------------------
    zis_n = _l2_normalize(zis_f)
    zjs_n = _l2_normalize(zjs_f)

    # Positives = diag(zis_n @ zjs_n.T) / T, in f32 (never touches bf16).
    pos = jnp.sum(zis_n * zjs_n, axis=-1, keepdims=True) * jnp.float32(inv_t)

    tb_r, tb_c, Bp = _choose_tiling(B)
    Dp = max(128, _round_up(D, 128))     # lane-pad feature dim (zeros are inert)

    # 1/T folded into the zis rows before the bf16 cast; zjs pre-transposed so
    # the kernel runs a standard (m,k)@(k,n) contraction with no XLU transpose.
    zis_bf = jnp.pad((zis_n * jnp.float32(inv_t)).astype(jnp.bfloat16),
                     ((0, Bp - B), (0, Dp - D)))               # (Bp, Dp)
    zjst_bf = jnp.pad(zjs_n.astype(jnp.bfloat16).T,
                      ((0, Dp - D), (0, Bp - B)))              # (Dp, Bp)

    # keep = 1 - eye - mask; zero on all padded rows/columns.
    keep = (1.0 - jnp.eye(B, dtype=jnp.float32) - mask.astype(jnp.float32))
    keep_bf = jnp.pad(keep.astype(jnp.bfloat16), ((0, Bp - B), (0, Bp - B)))
    pos_p = jnp.pad(pos, ((0, Bp - B), (0, 0)))                # (Bp, 1)

    grid = (Bp // tb_r, Bp // tb_c)

    # Per-generation VMEM limit (3/4 of physical: ~96 MiB v5e/v6e, ~48 MiB v7x).
    try:
        vmem_cap = pltpu.get_tpu_info().vmem_capacity_bytes
    except Exception:  # pragma: no cover - conservative fallback
        vmem_cap = 128 * 1024 * 1024
    vmem_limit = int(vmem_cap * 3 // 4)

    kernel = functools.partial(_ntxent_time_kernel, shift=inv_t)

    n_row_blocks = Bp // tb_r
    cost = pl.CostEstimate(
        flops=2 * Bp * Bp * Dp,
        transcendentals=Bp * Bp + 2 * Bp,
        bytes_accessed=(n_row_blocks * Bp * Dp * 2   # zjs re-streamed per row block
                        + Bp * Dp * 2                # zis (bf16) once
                        + Bp * Bp * 2                # keep (bf16)
                        + Bp * 4 + Bp * 4))          # positives + per-row loss

    per_row_loss = pl.pallas_call(
        kernel,
        out_shape=jax.ShapeDtypeStruct((Bp, 1), jnp.float32),
        grid=grid,
        in_specs=[
            # zis rows for this row block (invariant along j -> fetched once).
            pl.BlockSpec((tb_r, Dp), lambda i, j: (i, 0)),
            # pre-transposed zjs columns for this column block.
            pl.BlockSpec((Dp, tb_c), lambda i, j: (0, j)),
            # precomputed keep tile (bf16).
            pl.BlockSpec((tb_r, tb_c), lambda i, j: (i, j)),
            # precomputed positives (f32, already / T).
            pl.BlockSpec((tb_r, 1), lambda i, j: (i, 0)),
        ],
        out_specs=pl.BlockSpec((tb_r, 1), lambda i, j: (i, 0)),
        scratch_shapes=[
            pltpu.VMEM((tb_r, 1), jnp.float32),   # running sum of exp(negatives)
        ],
        compiler_params=pltpu.CompilerParams(
            dimension_semantics=("parallel", "arbitrary"),
            vmem_limit_bytes=vmem_limit),
        cost_estimate=cost,
    )(zis_bf, zjst_bf, keep_bf, pos_p)

    # Padded rows contribute exactly zero, but slice them off anyway; the
    # original divides by shape[0] == B.
    return jnp.sum(per_row_loss[:B]) / B


def _reference(zis, zjs, mask, temperature):
    """Pure-JAX f32 reference matching the PyTorch forward exactly."""
    B = zis.shape[0]
    zis = zis.reshape(B, -1)
    zjs = zjs.reshape(B, -1)
    zis = zis / jnp.maximum(jnp.linalg.norm(zis, axis=-1, keepdims=True), 1e-12)
    zjs = zjs / jnp.maximum(jnp.linalg.norm(zjs, axis=-1, keepdims=True), 1e-12)
    sim = zis @ zjs.T
    pos = jnp.diag(sim)[:, None] / temperature
    keep = 1.0 - jnp.eye(B, dtype=jnp.float32) - mask
    neg_sum = jnp.sum(jnp.exp(sim / temperature) * keep, axis=-1, keepdims=True)
    loss = -jnp.log(jnp.exp(pos) / (jnp.exp(pos) + neg_sum))
    return loss.sum() / B


if __name__ == "__main__":
    B, C, T = 8, 4, 16          # batch_size=8, flattened feature dim D = 64
    k = 2
    temperature = 0.5

    key = jax.random.PRNGKey(0)
    k1, k2 = jax.random.split(key)
    zis = jax.random.normal(k1, (B, C, T), dtype=jnp.float32)
    zjs = jax.random.normal(k2, (B, C, T), dtype=jnp.float32)

    # Deterministic off-diagonal mask with exactly k ones per row (as required
    # by the original `.view(B, B - 1 - k)`).
    idx = jnp.arange(B)
    mask = jnp.zeros((B, B), jnp.float32)
    mask = mask.at[idx, (idx + 1) % B].set(1.0)
    mask = mask.at[idx, (idx + 2) % B].set(1.0)

    out = ntxent_loss_time(zis, zjs, mask, k, temperature=temperature)
    out = jax.block_until_ready(out)

    ref = _reference(zis, zjs, mask, temperature)
    # Positives are full f32; only the negatives path goes through the bf16
    # MXU, so the deviation is well under 1%.
    # NOTE: for very small temperatures (<=0.1) the bf16 cosine error is
    # amplified by 1/T in the negative logits; use an f32 matmul there if the
    # loss is used for training at such temperatures.
    assert jnp.allclose(out, ref, rtol=2e-2, atol=2e-2), (out, ref)

    print("KERNEL_OK")
</pallas_src>

<mosaic_0001>
module attributes {stable_mosaic.version = 11 : i64} {
  func.func @_ntxent_time_kernel(%arg0: i32, %arg1: i32, %arg2: memref<64x128xbf16, #tpu.memory_space<vmem>>, %arg3: memref<128x128xbf16, #tpu.memory_space<vmem>>, %arg4: memref<64x128xbf16, #tpu.memory_space<vmem>>, %arg5: memref<64x1xf32, #tpu.memory_space<vmem>>, %arg6: memref<64x1xf32, #tpu.memory_space<vmem>>, %arg7: memref<64x1xf32, #tpu.memory_space<vmem>>) attributes {dimension_semantics = [#tpu.dimension_semantics<parallel>, #tpu.dimension_semantics<arbitrary>], iteration_bounds = array<i64: 2, 1>, scalar_prefetch = 0 : i64, scratch_operands = 1 : i64, tpu.core_type = #tpu.core_type<tc>, window_params = [{transform_indices = @transform_0, window_bounds = array<i64: 64, 128>}, {transform_indices = @transform_1, window_bounds = array<i64: 128, 128>}, {transform_indices = @transform_2, window_bounds = array<i64: 64, 128>}, {transform_indices = @transform_3, window_bounds = array<i64: 64, 1>}, {transform_indices = @transform_4, window_bounds = array<i64: 64, 1>}]} {
    %c0_i32 = arith.constant 0 : i32
    %0 = arith.cmpi eq, %arg1, %c0_i32 : i32
    %1 = arith.extui %0 : i1 to i32
    %c0_i32_0 = arith.constant 0 : i32
    %2 = arith.cmpi ne, %1, %c0_i32_0 : i32
    scf.if %2 {
      %cst_15 = arith.constant 0.000000e+00 : f32
      %20 = vector.broadcast %cst_15 : f32 to vector<64x1xf32>
      %c0_16 = arith.constant 0 : index
      %c0_17 = arith.constant 0 : index
      %21 = vector.load %arg7[%c0_16, %c0_17] : memref<64x1xf32, #tpu.memory_space<vmem>>, vector<64x1xf32>
      tpu.vector_store %arg7[%c0_16, %c0_17], %20 {strides = array<i32>} : memref<64x1xf32, #tpu.memory_space<vmem>>, vector<64x1xf32>,
    } else {
    }
    %c0 = arith.constant 0 : index
    %c0_1 = arith.constant 0 : index
    %3 = vector.load %arg2[%c0, %c0_1] : memref<64x128xbf16, #tpu.memory_space<vmem>>, vector<64x128xbf16>
    %c0_2 = arith.constant 0 : index
    %c0_3 = arith.constant 0 : index
    %4 = vector.load %arg3[%c0_2, %c0_3] : memref<128x128xbf16, #tpu.memory_space<vmem>>, vector<128x128xbf16>
    %cst = arith.constant dense<0.000000e+00> : vector<64x128xf32>
    %5 = tpu.matmul %3, %4, %cst {dimension_numbers = #tpu.dot_dimension_numbers<[1], [0], [0], [1], [0, 0, 1, 1], [], []>} : vector<64x128xbf16>, vector<128x128xbf16>, vector<64x128xf32> -> vector<64x128xf32>
    %c0_4 = arith.constant 0 : index
    %c0_5 = arith.constant 0 : index
    %6 = vector.load %arg7[%c0_4, %c0_5] : memref<64x1xf32, #tpu.memory_space<vmem>>, vector<64x1xf32>
    %cst_6 = arith.constant 2.000000e+00 : f32
    %7 = vector.broadcast %cst_6 : f32 to vector<64x128xf32>
    %8 = arith.subf %5, %7 : vector<64x128xf32>
    %9 = math.exp %8 : vector<64x128xf32>
    %c0_7 = arith.constant 0 : index
    %c0_8 = arith.constant 0 : index
    %10 = vector.load %arg4[%c0_7, %c0_8] : memref<64x128xbf16, #tpu.memory_space<vmem>>, vector<64x128xbf16>
    %11 = arith.extf %10 : vector<64x128xbf16> to vector<64x128xf32>
    %12 = arith.mulf %9, %11 : vector<64x128xf32>
    %cst_9 = arith.constant dense<0.000000e+00> : vector<64xf32>
    %13 = vector.multi_reduction <add>, %12, %cst_9 [1] : vector<64x128xf32> to vector<64xf32>
    %14 = vector.shape_cast %13 : vector<64xf32> to vector<64x1xf32>
    %15 = arith.addf %6, %14 : vector<64x1xf32>
    %c0_10 = arith.constant 0 : index
    %c0_11 = arith.constant 0 : index
    %16 = vector.load %arg7[%c0_10, %c0_11] : memref<64x1xf32, #tpu.memory_space<vmem>>, vector<64x1xf32>
    tpu.vector_store %arg7[%c0_10, %c0_11], %15 {strides = array<i32>} : memref<64x1xf32, #tpu.memory_space<vmem>>, vector<64x1xf32>,
    %c0_i32_12 = arith.constant 0 : i32
    %17 = arith.cmpi eq, %arg1, %c0_i32_12 : i32
    %18 = arith.extui %17 : i1 to i32
    %cst_13 = arith.constant 2.000000e+00 : f32
    %c0_i32_14 = arith.constant 0 : i32
    %19 = arith.cmpi ne, %18, %c0_i32_14 : i32
    scf.if %19 {
      %c0_15 = arith.constant 0 : index
      %c0_16 = arith.constant 0 : index
      %20 = vector.load %arg5[%c0_15, %c0_16] : memref<64x1xf32, #tpu.memory_space<vmem>>, vector<64x1xf32>
      %21 = vector.broadcast %cst_13 : f32 to vector<64x1xf32>
      %22 = arith.subf %20, %21 : vector<64x1xf32>
      %23 = math.exp %22 : vector<64x1xf32>
      %c0_17 = arith.constant 0 : index
      %c0_18 = arith.constant 0 : index
      %24 = vector.load %arg7[%c0_17, %c0_18] : memref<64x1xf32, #tpu.memory_space<vmem>>, vector<64x1xf32>
      %25 = arith.addf %23, %24 : vector<64x1xf32>
      %26 = math.log %25 : vector<64x1xf32>
      %27 = vector.broadcast %cst_13 : f32 to vector<64x1xf32>
      %28 = arith.addf %26, %27 : vector<64x1xf32>
      %29 = arith.subf %28, %20 : vector<64x1xf32>
      %c0_19 = arith.constant 0 : index
      %c0_20 = arith.constant 0 : index
      %30 = vector.load %arg6[%c0_19, %c0_20] : memref<64x1xf32, #tpu.memory_space<vmem>>, vector<64x1xf32>
      tpu.vector_store %arg6[%c0_19, %c0_20], %29 {strides = array<i32>} : memref<64x1xf32, #tpu.memory_space<vmem>>, vector<64x1xf32>,
    } else {
    }
    return
  }
  func.func @transform_0(%arg0: i32, %arg1: i32) -> (i32, i32) {
    %c0_i32 = arith.constant 0 : i32
    %c0_i32_0 = arith.constant 0 : i32
    return %arg0, %c0_i32 : i32, i32
  }
  func.func @transform_1(%arg0: i32, %arg1: i32) -> (i32, i32) {
    %c0_i32 = arith.constant 0 : i32
    %c0_i32_0 = arith.constant 0 : i32
    return %c0_i32, %arg1 : i32, i32
  }
  func.func @transform_2(%arg0: i32, %arg1: i32) -> (i32, i32) {
    %c0_i32 = arith.constant 0 : i32
    return %arg0, %arg1 : i32, i32
  }
  func.func @transform_3(%arg0: i32, %arg1: i32) -> (i32, i32) {
    %c0_i32 = arith.constant 0 : i32
    %c0_i32_0 = arith.constant 0 : i32
    return %arg0, %c0_i32 : i32, i32
  }
  func.func @transform_4(%arg0: i32, %arg1: i32) -> (i32, i32) {
    %c0_i32 = arith.constant 0 : i32
    %c0_i32_0 = arith.constant 0 : i32
    return %arg0, %c0_i32 : i32, i32
  }
}

</mosaic_0001>

<llo_original>
// kernel: tpu_custom_call.1
$region0: #{tpu_custom_call.1}
  #allocation0 [shape = 'u32[]', space=smem, size = 0x4, offset = 0x4, fixed_abs, tag = 'smem constant byte address 0x4 - core index']
  #allocation1 [shape = 'u32[144,128]{1,0:T(1,128)}', space=vmem, size = 0x12000, scoped, tag = 'internal scratch']
  #allocation2 [shape = 'f32[64,1]{1,0:T(8,128)}', space=vmem, size = 0x8000, scoped, tag = 'scratch operand']
  %s0 = inlined_call_operand.vmem [shape: bf16[128,128], index: 0, kind: input, shape index: {}]
  %s1 = inlined_call_operand.vmem [shape: bf16[128,128], index: 1, kind: input, shape index: {}]
  %s2 = inlined_call_operand.hbm [shape: bf16[128,128], index: 2, kind: input, shape index: {}]
  %s3 = inlined_call_operand.vmem [shape: f32[128,1], index: 3, kind: input, shape index: {}]
  %s4 = inlined_call_operand.vmem [shape: f32[128,1], index: 4, kind: output, shape index: {}]
  %s5 = sld [smem:[#allocation0]]
  $region61: #{tpu_custom_call.1} parent=0
    _
  %s7 = ssub.s32 1, %s5
  %s8 = scalar_select 0, %s7, %s5
  $region1: #{tpu_custom_call.1} parent=0
    #allocation3 [shape = 'u8[32768]{0}', space=vmem, size = 0x8000, scoped, tag = 'input window, operand 2']
    #allocation4 [shape = 's32[2]{0}', space=sflag, size = 0x8, scoped, tag = 'scoped memory for tpu_custom_call.1']
    %9 = vsyncpa [#allocation4], 0
    %s10 = scalar_lea.sflag [#allocation4], 1
    %11 = vsyncpa %s10, 0
    loop: start=0, step=1, limit=4
    $region2: #{tpu_custom_call.1} parent=1 // loop_pre_header
      _
    $region3: #{tpu_custom_call.1} parent=1 // loop_header
      %s13 = sphi 0, %s17
      %p14 = scmp.ge.s32.totalorder %s13, 4
      %s20 = sphi 0, %s32
      %s21 = sphi 0, %s28
      %s22 = sphi 0, %s20
      %s23 = sphi 0, %s21
      %s24 = sphi 0, %s22
      %s25 = sphi 0, %s23
      %s35 = sphi 0, %s37
      %s38 = sphi 0, %s35
      %s39 = sphi 0, %s38
      %s55 = sphi 0, %s39
      %s61 = sphi 0, %s63
      %s64 = sphi 0, %s61
      %s65 = sphi 0, %s64
      %s81 = sphi 0, %s65
      %s89 = sphi 0, %s91
      %s92 = sphi 0, %s89
      %s93 = sphi 0, %s92
      %s109 = sphi 0, %s93
      %s115 = sphi 0, %s117
      %s118 = sphi 0, %s115
      %s119 = sphi 0, %s118
      %s135 = sphi 0, %s119
      %s141 = sphi 0, %s143
      %s144 = sphi 0, %s141
      %s145 = sphi 0, %s144
      %s161 = sphi 0, %s145
    $region4: #{tpu_custom_call.1} parent=1 // loop_header_branch
      %16 = sbr.rel (%p14) target = $region8
    $region5: #{tpu_custom_call.1} parent=1 // loop_body
      %s18 = ssub.s32 %s13, 1
      %s19 = ssub.s32 %s13, 2
      %s26 = sadd.s32 1, %s21
      %p27 = scmp.ge.s32.totalorder %s26, 1
      %s28 = scalar_select %p27, 0, %s26
      %s29 = sadd.s32 1, %s20
      %s30 = scalar_select %p27, %s29, %s20
      %p31 = scmp.ge.s32.totalorder %s30, 2
      %s32 = scalar_select %p31, 0, %s30
      %s33 = ssub.s32 %s20, %s32
      %p34 = scmp.eq.s32.totalorder %s33, 0
      %s36 = sadd.s32 %s35, 1
      %s37 = scalar_select %p34, %s35, %s36
      %p40 = pneg %p34
      %p41 = scmp.eq.s32.totalorder %s13, 1
      %p42 = por %p40, %p41
      %p43 = scmp.ne.s32.totalorder %s35, %s38
      %p44 = scmp.eq.s32.totalorder %s13, 0
      %p45 = por %p43, %p44
      %p46 = scmp.ne.s32.totalorder %s35, %s38
      %p47 = scmp.eq.s32.totalorder %s18, 1
      %p48 = por %p46, %p47
      %p49 = scmp.ne.s32.totalorder %s38, %s39
      %p50 = scmp.eq.s32.totalorder %s18, 0
      %p51 = por %p49, %p50
      %p52 = scmp.ne.s32.totalorder %s38, %s39
      %p53 = scmp.eq.s32.totalorder %s19, 1
      %p54 = por %p52, %p53
      %p56 = scmp.ne.s32.totalorder %s39, %s55
      %p57 = scmp.eq.s32.totalorder %s19, 0
      %p58 = por %p56, %p57
      %s59 = ssub.s32 %s21, %s28
      %p60 = scmp.eq.s32.totalorder %s59, 0
      %s62 = sadd.s32 %s61, 1
      %s63 = scalar_select %p60, %s61, %s62
      %p66 = pneg %p60
      %p67 = scmp.eq.s32.totalorder %s13, 1
      %p68 = por %p66, %p67
      %p69 = scmp.ne.s32.totalorder %s61, %s64
      %p70 = scmp.eq.s32.totalorder %s13, 0
      %p71 = por %p69, %p70
      %p72 = scmp.ne.s32.totalorder %s61, %s64
      %p73 = scmp.eq.s32.totalorder %s18, 1
      %p74 = por %p72, %p73
      %p75 = scmp.ne.s32.totalorder %s64, %s65
      %p76 = scmp.eq.s32.totalorder %s18, 0
      %p77 = por %p75, %p76
      %p78 = scmp.ne.s32.totalorder %s64, %s65
      %p79 = scmp.eq.s32.totalorder %s19, 1
      %p80 = por %p78, %p79
      %p82 = scmp.ne.s32.totalorder %s65, %s81
      %p83 = scmp.eq.s32.totalorder %s19, 0
      %p84 = por %p82, %p83
      %s85 = ssub.s32 %s20, %s32
      %s86 = ssub.s32 %s21, %s28
      %s87 = sor.u32 %s85, %s86
      %p88 = scmp.eq.s32.totalorder %s87, 0
      %s90 = sadd.s32 %s89, 1
      %s91 = scalar_select %p88, %s89, %s90
      %p94 = pneg %p88
      %p95 = scmp.eq.s32.totalorder %s13, 1
      %p96 = por %p94, %p95
      %p97 = scmp.ne.s32.totalorder %s89, %s92
      %p98 = scmp.eq.s32.totalorder %s13, 0
      %p99 = por %p97, %p98
      %p100 = scmp.ne.s32.totalorder %s89, %s92
      %p101 = scmp.eq.s32.totalorder %s18, 1
      %p102 = por %p100, %p101
      %p103 = scmp.ne.s32.totalorder %s92, %s93
      %p104 = scmp.eq.s32.totalorder %s18, 0
      %p105 = por %p103, %p104
      %p106 = scmp.ne.s32.totalorder %s92, %s93
      %p107 = scmp.eq.s32.totalorder %s19, 1
      %p108 = por %p106, %p107
      %p110 = scmp.ne.s32.totalorder %s93, %s109
      %p111 = scmp.eq.s32.totalorder %s19, 0
      %p112 = por %p110, %p111
      %s113 = ssub.s32 %s20, %s32
      %p114 = scmp.eq.s32.totalorder %s113, 0
      %s116 = sadd.s32 %s115, 1
      %s117 = scalar_select %p114, %s115, %s116
      %p120 = pneg %p114
      %p121 = scmp.eq.s32.totalorder %s13, 1
      %p122 = por %p120, %p121
      %p123 = scmp.ne.s32.totalorder %s115, %s118
      %p124 = scmp.eq.s32.totalorder %s13, 0
      %p125 = por %p123, %p124
      %p126 = scmp.ne.s32.totalorder %s115, %s118
      %p127 = scmp.eq.s32.totalorder %s18, 1
      %p128 = por %p126, %p127
      %p129 = scmp.ne.s32.totalorder %s118, %s119
      %p130 = scmp.eq.s32.totalorder %s18, 0
      %p131 = por %p129, %p130
      %p132 = scmp.ne.s32.totalorder %s118, %s119
      %p133 = scmp.eq.s32.totalorder %s19, 1
      %p134 = por %p132, %p133
      %p136 = scmp.ne.s32.totalorder %s119, %s135
      %p137 = scmp.eq.s32.totalorder %s19, 0
      %p138 = por %p136, %p137
      %s139 = ssub.s32 %s20, %s32
      %p140 = scmp.eq.s32.totalorder %s139, 0
      %s142 = sadd.s32 %s141, 1
      %s143 = scalar_select %p140, %s141, %s142
      %p146 = pneg %p140
      %p147 = scmp.eq.s32.totalorder %s13, 1
      %p148 = por %p146, %p147
      %p149 = scmp.ne.s32.totalorder %s141, %s144
      %p150 = scmp.eq.s32.totalorder %s13, 0
      %p151 = por %p149, %p150
      %p152 = scmp.ne.s32.totalorder %s141, %s144
      %p153 = scmp.eq.s32.totalorder %s18, 1
      %p154 = por %p152, %p153
      %p155 = scmp.ne.s32.totalorder %s144, %s145
      %p156 = scmp.eq.s32.totalorder %s18, 0
      %p157 = por %p155, %p156
      %p158 = scmp.ne.s32.totalorder %s144, %s145
      %p159 = scmp.eq.s32.totalorder %s19, 1
      %p160 = por %p158, %p159
      %p162 = scmp.ne.s32.totalorder %s145, %s161
      %p163 = scmp.eq.s32.totalorder %s19, 0
      %p164 = por %p162, %p163
      %p165 = scmp.le.s32.totalorder 1, %s13
      %p166 = scmp.lt.s32.totalorder %s13, 3
      %p167 = pnand %p165, %p166
      %p168 = pneg %p167
      // Predicated region
      $region9: #{tpu_custom_call.1} parent=5 // pred_check
        _
      $region10: #{tpu_custom_call.1} parent=5 // pred_check_branch
        %170 = sbr.rel (%p167) target = $region12
      $region11: #{tpu_custom_call.1} parent=5 // pred_region
        %s171 = ssub.s32 %s13, 1
        // Predicated region
        $region13: #{tpu_custom_call.1} parent=11 // pred_check
          %p172 = pneg %p77
        $region14: #{tpu_custom_call.1} parent=11 // pred_check_branch
          %174 = sbr.rel (%p172) target = $region16
        $region15: #{tpu_custom_call.1} parent=11 // pred_region
          %p175 = scmp.lt.s32.totalorder %s23, 0
          %s176 = scalar_select %p175, %s23, 0
          %s177 = smul.addr %s176, 4
          %s178 = scalar_lea.vmem %s1, %s177
        $region16: #{tpu_custom_call.1} parent=11 // pred_fallthru
          _
      $region12: #{tpu_custom_call.1} parent=5 // pred_fallthru
        _
      %p179 = scmp.lt.s32.totalorder %s13, 2
      // Predicated region
      $region17: #{tpu_custom_call.1} parent=5 // pred_check
        %p180 = pneg %p179
      $region18: #{tpu_custom_call.1} parent=5 // pred_check_branch
        %182 = sbr.rel (%p180) target = $region20
      $region19: #{tpu_custom_call.1} parent=5 // pred_region
        // Predicated region
        $region21: #{tpu_custom_call.1} parent=19 // pred_check
          %p183 = pneg %p45
        $region22: #{tpu_custom_call.1} parent=19 // pred_check_branch
          %185 = sbr.rel (%p183) target = $region24
        $region23: #{tpu_custom_call.1} parent=19 // pred_region
          %s186 = smul.u32 8, %s20
          %p187 = scmp.lt.s32.totalorder %s186, 15
          %s188 = scalar_select %p187, %s186, 15
          %s189 = smul.addr %s188, 4
          %s190 = scalar_lea.vmem %s0, %s189
          %s191 = smul.u32 8, %s20
        $region24: #{tpu_custom_call.1} parent=19 // pred_fallthru
          _
        // Predicated region
        $region25: #{tpu_custom_call.1} parent=19 // pred_check
          %p192 = pneg %p99
        $region26: #{tpu_custom_call.1} parent=19 // pred_check_branch
          %194 = sbr.rel (%p192) target = $region28
        $region27: #{tpu_custom_call.1} parent=19 // pred_region
          %s195 = sand.u32 %s89, 1
          %s196 = scalar_lea.sflag [#allocation4], %s195
          %s197 = sand.u32 %s89, 1
          %s198 = smul.addr %s197, 32
          %s199 = scalar_lea.vmem [#allocation3], %s198
          %s200 = smul.u32 8, %s20
          %s202 = ssub.s32 512, 512
          %203 = vsyncadd %s196, %s202
          %s204 = sadd.s32 %s21, %s200
          %s205 = smul.addr %s204, 64
          %s206 = scalar_lea.hbm %s2, %s205
          %s207 = sshll.u32 %s199, 4
          %s208 = int_to_ptr.vmem [resolvable:$true] %s207
          %213 = dma.hbm_to_vmem [thread:$0]  %s206, 512, %s208, %s196, 64, 64, 4
        $region28: #{tpu_custom_call.1} parent=19 // pred_fallthru
          _
        // Predicated region
        $region29: #{tpu_custom_call.1} parent=19 // pred_check
          %p214 = pneg %p125
        $region30: #{tpu_custom_call.1} parent=19 // pred_check_branch
          %216 = sbr.rel (%p214) target = $region32
        $region31: #{tpu_custom_call.1} parent=19 // pred_region
          %s217 = smul.u32 8, %s20
          %p218 = scmp.lt.s32.totalorder %s217, 15
          %s219 = scalar_select %p218, %s217, 15
          %s220 = smul.addr %s219, 8
          %s221 = scalar_lea.vmem %s3, %s220
          %s222 = smul.u32 8, %s20
        $region32: #{tpu_custom_call.1} parent=19 // pred_fallthru
          _
      $region20: #{tpu_custom_call.1} parent=5 // pred_fallthru
        _
      %p223 = scmp.le.s32.totalorder 1, %s13
      %p224 = scmp.lt.s32.totalorder %s13, 3
      %p225 = pnand %p223, %p224
      %p226 = pneg %p225
      // Predicated region
      $region33: #{tpu_custom_call.1} parent=5 // pred_check
        _
      $region34: #{tpu_custom_call.1} parent=5 // pred_check_branch
        %228 = sbr.rel (%p225) target = $region36
      $region35: #{tpu_custom_call.1} parent=5 // pred_region
        %s229 = ssub.s32 %s13, 1
        %s230 = sand.u32 %s92, 1
        %s231 = scalar_lea.sflag [#allocation4], %s230
        %s232 = sand.u32 %s92, 1
        %s233 = smul.addr %s232, 32
        %s234 = scalar_lea.vmem [#allocation3], %s233
        // Predicated region
        $region37: #{tpu_custom_call.1} parent=35 // pred_check
          %p235 = pneg %p105
        $region38: #{tpu_custom_call.1} parent=35 // pred_check_branch
          %237 = sbr.rel (%p235) target = $region40
        $region39: #{tpu_custom_call.1} parent=35 // pred_region
          %238 = dma.done %s231, 512
        $region40: #{tpu_custom_call.1} parent=35 // pred_fallthru
          _
        %s239 = smul.u32 8, %s22
        %p240 = scmp.lt.s32.totalorder %s239, 15
        %s241 = scalar_select %p240, %s239, 15
        %s242 = smul.addr %s241, 4
        %s243 = scalar_lea.vmem %s0, %s242
        %p244 = pneg %p51
        %p245 = pneg %p48
        %p246 = scmp.lt.s32.totalorder %s23, 0
        %s247 = scalar_select %p246, %s23, 0
        %s248 = smul.addr %s247, 4
        %s249 = scalar_lea.vmem %s1, %s248
        %p250 = pneg %p77
        %p251 = pneg %p74
        %s252 = sand.u32 %s92, 1
        %s253 = scalar_lea.sflag [#allocation4], %s252
        %s254 = sand.u32 %s92, 1
        %s255 = smul.addr %s254, 32
        %s256 = scalar_lea.vmem [#allocation3], %s255
        %p257 = pneg %p105
        %p258 = pneg %p102
        %s259 = smul.u32 8, %s22
        %p260 = scmp.lt.s32.totalorder %s259, 15
        %s261 = scalar_select %p260, %s259, 15
        %s262 = smul.addr %s261, 8
        %s263 = scalar_lea.vmem %s3, %s262
        %p264 = pneg %p131
        %p265 = pneg %p128
        %p266 = pneg %p157
        %p267 = pneg %p154
        %s268 = smul.u32 8, %s22
        %p269 = scmp.lt.s32.totalorder %s268, 15
        %s270 = scalar_select %p269, %s268, 15
        %s271 = smul.addr %s270, 8
        %s272 = scalar_lea.vmem %s4, %s271
        %s273 = smul.u32 8, %s22
        %p274 = scmp.lt.s32.totalorder %s273, 15
        %s275 = scalar_select %p274, %s273, 15
        %s276 = smul.addr %s275, 4
        %s277 = scalar_lea.vmem %s0, %s276
        %s278 = smul.u32 8, %s22
        %p279 = scmp.lt.s32.totalorder %s23, 0
        %s280 = scalar_select %p279, %s23, 0
        %s281 = smul.addr %s280, 4
        %s282 = scalar_lea.vmem %s1, %s281
        %s283 = smul.u32 8, %s22
        %s284 = smul.u32 8, %s22
        %p285 = scmp.lt.s32.totalorder %s284, 15
        %s286 = scalar_select %p285, %s284, 15
        %s287 = smul.addr %s286, 8
        %s288 = scalar_lea.vmem %s3, %s287
        %s289 = smul.u32 8, %s22
        %s290 = smul.u32 8, %s22
        %p291 = scmp.lt.s32.totalorder %s290, 15
        %s292 = scalar_select %p291, %s290, 15
        %s293 = smul.addr %s292, 8
        %s294 = scalar_lea.vmem %s4, %s293
        %s295 = smul.u32 8, %s22
        %p297 = scmp.eq.s32.totalorder %s23, 0
        // Predicated region
        $region41: #{tpu_custom_call.1} parent=35 // pred_check
          %p298 = pneg %p297
        $region42: #{tpu_custom_call.1} parent=35 // pred_check_branch
          %300 = sbr.rel (%p298) target = $region44
        $region43: #{tpu_custom_call.1} parent=35 // pred_region
          %vm301 = vcmask 7168
          %302 = vst.msk [vmem:[#allocation2] sm:$0xff] %vm301, 0.0
          %303 = vst.msk [vmem:[#allocation2 + $0x8] sm:$0xff] %vm301, 0.0
          %304 = vst.msk [vmem:[#allocation2 + $0x10] sm:$0xff] %vm301, 0.0
          %305 = vst.msk [vmem:[#allocation2 + $0x18] sm:$0xff] %vm301, 0.0
          %306 = vst.msk [vmem:[#allocation2 + $0x20] sm:$0xff] %vm301, 0.0
          %307 = vst.msk [vmem:[#allocation2 + $0x28] sm:$0xff] %vm301, 0.0
          %308 = vst.msk [vmem:[#allocation2 + $0x30] sm:$0xff] %vm301, 0.0
          %309 = vst.msk [vmem:[#allocation2 + $0x38] sm:$0xff] %vm301, 0.0
        $region44: #{tpu_custom_call.1} parent=35 // pred_fallthru
          _
        %v310 = vld [vmem:[%s277] sm:$0xf]
        %v311 = vld [vmem:[%s277 + $0x4] sm:$0xf]
        %v312 = vld [vmem:[%s277 + $0x8] sm:$0xf]
        %v313 = vld [vmem:[%s277 + $0xc] sm:$0xf]
        %v314 = vld [vmem:[%s277 + $0x10] sm:$0xf]
        %v315 = vld [vmem:[%s277 + $0x14] sm:$0xf]
        %v316 = vld [vmem:[%s277 + $0x18] sm:$0xf]
        %v317 = vld [vmem:[%s277 + $0x1c] sm:$0xf]
        %v318 = vld [vmem:[%s282] sm:$0xf]
        %v319 = vld [vmem:[%s282 + $0x4] sm:$0xf]
        %v320 = vld [vmem:[%s282 + $0x8] sm:$0xf]
        %v321 = vld [vmem:[%s282 + $0xc] sm:$0xf]
        %v322 = vld [vmem:[%s282 + $0x10] sm:$0xf]
        %v323 = vld [vmem:[%s282 + $0x14] sm:$0xf]
        %v324 = vld [vmem:[%s282 + $0x18] sm:$0xf]
        %v325 = vld [vmem:[%s282 + $0x1c] sm:$0xf]
        %v326 = vld [vmem:[%s282 + $0x20] sm:$0xf]
        %v327 = vld [vmem:[%s282 + $0x24] sm:$0xf]
        %v328 = vld [vmem:[%s282 + $0x28] sm:$0xf]
        %v329 = vld [vmem:[%s282 + $0x2c] sm:$0xf]
        %v330 = vld [vmem:[%s282 + $0x30] sm:$0xf]
        %v331 = vld [vmem:[%s282 + $0x34] sm:$0xf]
        %v332 = vld [vmem:[%s282 + $0x38] sm:$0xf]
        %v333 = vld [vmem:[%s282 + $0x3c] sm:$0xf]
        %v342 = vunpack.c.l.b16 %v310
        %v343 = vunpack.c.l.b16 %v311
        %v344 = vunpack.c.l.b16 %v312
        %v345 = vunpack.c.l.b16 %v313
        %v346 = vunpack.c.l.b16 %v314
        %v347 = vunpack.c.l.b16 %v315
        %v348 = vunpack.c.l.b16 %v316
        %v349 = vunpack.c.l.b16 %v317
        %v350 = vpack.c.b16 %v343, %v342
        %v351 = vpack.c.b16 %v345, %v344
        %v352 = vpack.c.b16 %v347, %v346
        %v353 = vpack.c.b16 %v349, %v348
        %v374 = vunpack.c.l.b16 %v318
        %v375 = vunpack.c.l.b16 %v319
        %v376 = vunpack.c.l.b16 %v320
        %v377 = vunpack.c.l.b16 %v321
        %v378 = vunpack.c.l.b16 %v322
        %v379 = vunpack.c.l.b16 %v323
        %v380 = vunpack.c.l.b16 %v324
        %v381 = vunpack.c.l.b16 %v325
        %v382 = vunpack.c.l.b16 %v326
        %v383 = vunpack.c.l.b16 %v327
        %v384 = vunpack.c.l.b16 %v328
        %v385 = vunpack.c.l.b16 %v329
        %v386 = vunpack.c.l.b16 %v330
        %v387 = vunpack.c.l.b16 %v331
        %v388 = vunpack.c.l.b16 %v332
        %v389 = vunpack.c.l.b16 %v333
        %v390 = vpack.c.b16 %v375, %v374
        %v391 = vpack.c.b16 %v377, %v376
        %v392 = vpack.c.b16 %v379, %v378
        %v393 = vpack.c.b16 %v381, %v380
        %v394 = vpack.c.b16 %v383, %v382
        %v395 = vpack.c.b16 %v385, %v384
        %v396 = vpack.c.b16 %v387, %v386
        %v397 = vpack.c.b16 %v389, %v388
        %406 = vmatprep.subr.bf16.mxu0 0
        %407 = vmatpush1.bf16.msra.mxu0 %v397
        %408 = vmatprep.subr.bf16.mxu0 0
        %409 = vmatpush1.bf16.msra.mxu0 %v396
        %410 = vmatprep.subr.bf16.mxu0 0
        %411 = vmatpush1.bf16.msra.mxu0 %v395
        %412 = vmatprep.subr.bf16.mxu0 0
        %413 = vmatpush1.bf16.msra.mxu0 %v394
        %414 = vmatprep.subr.bf16.mxu0 0
        %415 = vmatpush1.bf16.msra.mxu0 %v393
        %416 = vmatprep.subr.bf16.mxu0 0
        %417 = vmatpush1.bf16.msra.mxu0 %v392
        %418 = vmatprep.subr.bf16.mxu0 0
        %419 = vmatpush1.bf16.msra.mxu0 %v391
        %420 = vmatprep.subr.bf16.mxu0 0
        %421 = vmatpush1.bf16.msra.mxu0 %v390
        %422 = vmatprep.subr.bf16.mxu0 0
        %423 = vmatpush2.bf16.msra.mxu0 0
        %424 = vmatprep.subr.bf16.mxu0 0
        %425 = vmatpush2.bf16.msra.mxu0 0
        %426 = vmatprep.subr.bf16.mxu0 0
        %427 = vmatpush2.bf16.msra.mxu0 0
        %428 = vmatprep.subr.bf16.mxu0 0
        %429 = vmatpush2.bf16.msra.mxu0 0
        %430 = vmatprep.subr.bf16.mxu0 0
        %431 = vmatpush2.bf16.msra.mxu0 0
        %432 = vmatprep.subr.bf16.mxu0 0
        %433 = vmatpush2.bf16.msra.mxu0 0
        %434 = vmatprep.subr.bf16.mxu0 0
        %435 = vmatpush2.bf16.msra.mxu0 0
        %436 = vmatprep.subr.bf16.mxu0 0
        %437 = vmatpush2.bf16.msra.mxu0 0
        %438 = vmatprep.mubr.bf16.mxu0 0
        %439 = vmatmul.mubr.bf16.gmra.mxu0 %v350
        %v440 = vpop.f32.mrf.mxu0
        %v441 = vadd.f32 0.0, %v440
        %v442 = vpop.f32.mrf.mxu0
        %v443 = vpop.f32.mrf.mxu0
        %v444 = vadd.f32 0.0, %v443
        %v445 = vpop.f32.mrf.mxu0
        %446 = vmatprep.mubr.bf16.mxu0 0
        %447 = vmatmul.mubr.bf16.gmra.mxu0 %v351
        %v448 = vpop.f32.mrf.mxu0
        %v449 = vadd.f32 0.0, %v448
        %v450 = vpop.f32.mrf.mxu0
        %v451 = vpop.f32.mrf.mxu0
        %v452 = vadd.f32 0.0, %v451
        %v453 = vpop.f32.mrf.mxu0
        %454 = vmatprep.mubr.bf16.mxu0 0
        %455 = vmatmul.mubr.bf16.gmra.mxu0 %v352
        %v456 = vpop.f32.mrf.mxu0
        %v457 = vadd.f32 0.0, %v456
        %v458 = vpop.f32.mrf.mxu0
        %v459 = vpop.f32.mrf.mxu0
        %v460 = vadd.f32 0.0, %v459
        %v461 = vpop.f32.mrf.mxu0
        %462 = vmatprep.mubr.bf16.mxu0 0
        %463 = vmatmul.mubr.bf16.gmra.mxu0 %v353
        %v464 = vpop.f32.mrf.mxu0
        %v465 = vadd.f32 0.0, %v464
        %v466 = vpop.f32.mrf.mxu0
        %v467 = vpop.f32.mrf.mxu0
        %v468 = vadd.f32 0.0, %v467
        %v469 = vpop.f32.mrf.mxu0
        %470 = vdwg.mxu0
        %v471 = vld [vmem:[#allocation2] sm:$0xff]
        %v472 = vld [vmem:[#allocation2 + $0x8] sm:$0xff]
        %v473 = vld [vmem:[#allocation2 + $0x10] sm:$0xff]
        %v474 = vld [vmem:[#allocation2 + $0x18] sm:$0xff]
        %v475 = vld [vmem:[#allocation2 + $0x20] sm:$0xff]
        %v476 = vld [vmem:[#allocation2 + $0x28] sm:$0xff]
        %v477 = vld [vmem:[#allocation2 + $0x30] sm:$0xff]
        %v478 = vld [vmem:[#allocation2 + $0x38] sm:$0xff]
        %v479 = vsub.f32 %v441, 2.0
        %v480 = vsub.f32 %v444, 2.0
        %v481 = vsub.f32 %v449, 2.0
        %v482 = vsub.f32 %v452, 2.0
        %v483 = vsub.f32 %v457, 2.0
        %v484 = vsub.f32 %v460, 2.0
        %v485 = vsub.f32 %v465, 2.0
        %v486 = vsub.f32 %v468, 2.0
        %v487 = vmul.f32 %v479, 1.442695
        %v488 = vpow.pop %v487
        %v489 = vmul.f32 %v480, 1.442695
        %v490 = vpow.pop %v489
        %v491 = vmul.f32 %v481, 1.442695
        %v492 = vpow.pop %v491
        %v493 = vmul.f32 %v482, 1.442695
        %v494 = vpow.pop %v493
        %v495 = vmul.f32 %v483, 1.442695
        %v496 = vpow.pop %v495
        %v497 = vmul.f32 %v484, 1.442695
        %v498 = vpow.pop %v497
        %v499 = vmul.f32 %v485, 1.442695
        %v500 = vpow.pop %v499
        %v501 = vmul.f32 %v486, 1.442695
        %v502 = vpow.pop %v501
        %v503 = vld [vmem:[%s234] sm:$0xf]
        %v504 = vld [vmem:[%s234 + $0x4] sm:$0xf]
        %v505 = vld [vmem:[%s234 + $0x8] sm:$0xf]
        %v506 = vld [vmem:[%s234 + $0xc] sm:$0xf]
        %v507 = vld [vmem:[%s234 + $0x10] sm:$0xf]
        %v508 = vld [vmem:[%s234 + $0x14] sm:$0xf]
        %v509 = vld [vmem:[%s234 + $0x18] sm:$0xf]
        %v510 = vld [vmem:[%s234 + $0x1c] sm:$0xf]
        %v511 = vunpack.c.l.bf16 %v503
        %v512 = vunpack.c.l.bf16 %v504
        %v513 = vunpack.c.l.bf16 %v505
        %v514 = vunpack.c.l.bf16 %v506
        %v515 = vunpack.c.l.bf16 %v507
        %v516 = vunpack.c.l.bf16 %v508
        %v517 = vunpack.c.l.bf16 %v509
        %v518 = vunpack.c.l.bf16 %v510
        %v519 = vmul.f32 %v488, %v511
        %v520 = vmul.f32 %v490, %v512
        %v521 = vmul.f32 %v492, %v513
        %v522 = vmul.f32 %v494, %v514
        %v523 = vmul.f32 %v496, %v515
        %v524 = vmul.f32 %v498, %v516
        %v525 = vmul.f32 %v500, %v517
        %v526 = vmul.f32 %v502, %v518
        %527 = vadd.xlane.f32.xlu0 %v519
        %v528 = vpop.xlane.xlu0 %527
        %529 = vadd.xlane.f32.xlu0 %v520
        %v530 = vpop.xlane.xlu0 %529
        %531 = vadd.xlane.f32.xlu0 %v521
        %v532 = vpop.xlane.xlu0 %531
        %533 = vadd.xlane.f32.xlu0 %v522
        %v534 = vpop.xlane.xlu0 %533
        %535 = vadd.xlane.f32.xlu0 %v523
        %v536 = vpop.xlane.xlu0 %535
        %537 = vadd.xlane.f32.xlu0 %v524
        %v538 = vpop.xlane.xlu0 %537
        %539 = vadd.xlane.f32.xlu0 %v525
        %v540 = vpop.xlane.xlu0 %539
        %541 = vadd.xlane.f32.xlu0 %v526
        %v542 = vpop.xlane.xlu0 %541
        %v543 = vadd.f32 %v471, %v528
        %v544 = vadd.f32 %v472, %v530
        %v545 = vadd.f32 %v473, %v532
        %v546 = vadd.f32 %v474, %v534
        %v547 = vadd.f32 %v475, %v536
        %v548 = vadd.f32 %v476, %v538
        %v549 = vadd.f32 %v477, %v540
        %v550 = vadd.f32 %v478, %v542
        %vm551 = vcmask 7168
        %552 = vst.msk [vmem:[#allocation2] sm:$0xff] %vm551, %v543
        %553 = vst.msk [vmem:[#allocation2 + $0x8] sm:$0xff] %vm551, %v544
        %554 = vst.msk [vmem:[#allocation2 + $0x10] sm:$0xff] %vm551, %v545
        %555 = vst.msk [vmem:[#allocation2 + $0x18] sm:$0xff] %vm551, %v546
        %556 = vst.msk [vmem:[#allocation2 + $0x20] sm:$0xff] %vm551, %v547
        %557 = vst.msk [vmem:[#allocation2 + $0x28] sm:$0xff] %vm551, %v548
        %558 = vst.msk [vmem:[#allocation2 + $0x30] sm:$0xff] %vm551, %v549
        %559 = vst.msk [vmem:[#allocation2 + $0x38] sm:$0xff] %vm551, %v550
        // Predicated region
        $region45: #{tpu_custom_call.1} parent=35 // pred_check
          %p560 = pneg %p297
        $region46: #{tpu_custom_call.1} parent=35 // pred_check_branch
          %562 = sbr.rel (%p560) target = $region48
        $region47: #{tpu_custom_call.1} parent=35 // pred_region
          %v563 = vld [vmem:[%s288] sm:$0xff]
          %v564 = vld [vmem:[%s288 + $0x8] sm:$0xff]
          %v565 = vld [vmem:[%s288 + $0x10] sm:$0xff]
          %v566 = vld [vmem:[%s288 + $0x18] sm:$0xff]
          %v567 = vld [vmem:[%s288 + $0x20] sm:$0xff]
          %v568 = vld [vmem:[%s288 + $0x28] sm:$0xff]
          %v569 = vld [vmem:[%s288 + $0x30] sm:$0xff]
          %v570 = vld [vmem:[%s288 + $0x38] sm:$0xff]
          %v571 = vsub.f32 %v563, 2.0
          %v572 = vsub.f32 %v564, 2.0
          %v573 = vsub.f32 %v565, 2.0
          %v574 = vsub.f32 %v566, 2.0
          %v575 = vsub.f32 %v567, 2.0
          %v576 = vsub.f32 %v568, 2.0
          %v577 = vsub.f32 %v569, 2.0
          %v578 = vsub.f32 %v570, 2.0
          %v579 = vmul.f32 %v571, 1.442695
          %v580 = vpow.pop %v579
          %v581 = vmul.f32 %v572, 1.442695
          %v582 = vpow.pop %v581
          %v583 = vmul.f32 %v573, 1.442695
          %v584 = vpow.pop %v583
          %v585 = vmul.f32 %v574, 1.442695
          %v586 = vpow.pop %v585
          %v587 = vmul.f32 %v575, 1.442695
          %v588 = vpow.pop %v587
          %v589 = vmul.f32 %v576, 1.442695
          %v590 = vpow.pop %v589
          %v591 = vmul.f32 %v577, 1.442695
          %v592 = vpow.pop %v591
          %v593 = vmul.f32 %v578, 1.442695
          %v594 = vpow.pop %v593
          %v595 = vld [vmem:[#allocation2] sm:$0xff]
          %v596 = vld [vmem:[#allocation2 + $0x8] sm:$0xff]
          %v597 = vld [vmem:[#allocation2 + $0x10] sm:$0xff]
          %v598 = vld [vmem:[#allocation2 + $0x18] sm:$0xff]
          %v599 = vld [vmem:[#allocation2 + $0x20] sm:$0xff]
          %v600 = vld [vmem:[#allocation2 + $0x28] sm:$0xff]
          %v601 = vld [vmem:[#allocation2 + $0x30] sm:$0xff]
          %v602 = vld [vmem:[#allocation2 + $0x38] sm:$0xff]
          %v603 = vadd.f32 %v580, %v595
          %v604 = vadd.f32 %v582, %v596
          %v605 = vadd.f32 %v584, %v597
          %v606 = vadd.f32 %v586, %v598
          %v607 = vadd.f32 %v588, %v599
          %v608 = vadd.f32 %v590, %v600
          %v609 = vadd.f32 %v592, %v601
          %v610 = vadd.f32 %v594, %v602
          %v611 = vlog2.pop %v603
          %v612 = vmul.f32 %v611, 0.6931472
          %v613 = vlog2.pop %v604
          %v614 = vmul.f32 %v613, 0.6931472
          %v615 = vlog2.pop %v605
          %v616 = vmul.f32 %v615, 0.6931472
          %v617 = vlog2.pop %v606
          %v618 = vmul.f32 %v617, 0.6931472
          %v619 = vlog2.pop %v607
          %v620 = vmul.f32 %v619, 0.6931472
          %v621 = vlog2.pop %v608
          %v622 = vmul.f32 %v621, 0.6931472
          %v623 = vlog2.pop %v609
          %v624 = vmul.f32 %v623, 0.6931472
          %v625 = vlog2.pop %v610
          %v626 = vmul.f32 %v625, 0.6931472
          %v627 = vadd.f32 %v612, 2.0
          %v628 = vadd.f32 %v614, 2.0
          %v629 = vadd.f32 %v616, 2.0
          %v630 = vadd.f32 %v618, 2.0
          %v631 = vadd.f32 %v620, 2.0
          %v632 = vadd.f32 %v622, 2.0
          %v633 = vadd.f32 %v624, 2.0
          %v634 = vadd.f32 %v626, 2.0
          %v635 = vsub.f32 %v627, %v563
          %v636 = vsub.f32 %v628, %v564
          %v637 = vsub.f32 %v629, %v565
          %v638 = vsub.f32 %v630, %v566
          %v639 = vsub.f32 %v631, %v567
          %v640 = vsub.f32 %v632, %v568
          %v641 = vsub.f32 %v633, %v569
          %v642 = vsub.f32 %v634, %v570
          %643 = vst.msk [vmem:[%s294] sm:$0xff] %vm551, %v635
          %644 = vst.msk [vmem:[%s294 + $0x8] sm:$0xff] %vm551, %v636
          %645 = vst.msk [vmem:[%s294 + $0x10] sm:$0xff] %vm551, %v637
          %646 = vst.msk [vmem:[%s294 + $0x18] sm:$0xff] %vm551, %v638
          %647 = vst.msk [vmem:[%s294 + $0x20] sm:$0xff] %vm551, %v639
          %648 = vst.msk [vmem:[%s294 + $0x28] sm:$0xff] %vm551, %v640
          %649 = vst.msk [vmem:[%s294 + $0x30] sm:$0xff] %vm551, %v641
          %650 = vst.msk [vmem:[%s294 + $0x38] sm:$0xff] %vm551, %v642
        $region48: #{tpu_custom_call.1} parent=35 // pred_fallthru
          _
        %s651 = smul.u32 8, %s22
        %p652 = scmp.lt.s32.totalorder %s651, 15
        %s653 = scalar_select %p652, %s651, 15
        %s654 = smul.addr %s653, 8
        %s655 = scalar_lea.vmem %s4, %s654
        // Predicated region
        $region49: #{tpu_custom_call.1} parent=35 // pred_check
          %p656 = pneg %p154
        $region50: #{tpu_custom_call.1} parent=35 // pred_check_branch
          %658 = sbr.rel (%p656) target = $region52
        $region51: #{tpu_custom_call.1} parent=35 // pred_region
          %s659 = smul.u32 8, %s22
        $region52: #{tpu_custom_call.1} parent=35 // pred_fallthru
          _
      $region36: #{tpu_custom_call.1} parent=5 // pred_fallthru
        _
      %p660 = scmp.le.s32.totalorder 2, %s13
      // Predicated region
      $region53: #{tpu_custom_call.1} parent=5 // pred_check
        %p661 = pneg %p660
      $region54: #{tpu_custom_call.1} parent=5 // pred_check_branch
        %663 = sbr.rel (%p661) target = $region56
      $region55: #{tpu_custom_call.1} parent=5 // pred_region
        %s664 = ssub.s32 %s13, 2
        // Predicated region
        $region57: #{tpu_custom_call.1} parent=55 // pred_check
          %p665 = pneg %p160
        $region58: #{tpu_custom_call.1} parent=55 // pred_check_branch
          %667 = sbr.rel (%p665) target = $region60
        $region59: #{tpu_custom_call.1} parent=55 // pred_region
          %s668 = smul.u32 8, %s24
          %p669 = scmp.lt.s32.totalorder %s668, 15
          %s670 = scalar_select %p669, %s668, 15
          %s671 = smul.addr %s670, 8
          %s672 = scalar_lea.vmem %s4, %s671
        $region60: #{tpu_custom_call.1} parent=55 // pred_fallthru
          _
      $region56: #{tpu_custom_call.1} parent=5 // pred_fallthru
        _
    $region6: #{tpu_custom_call.1} parent=1 // loop_footer
      %s17 = sadd.s32 1, %s13
    $region7: #{tpu_custom_call.1} parent=1 // loop_footer_branch
      %12 = sbr.rel target = $region3
    $region8: #{tpu_custom_call.1} parent=1 // loop_exit
      _
    %673 = vsyncpa [#allocation4], 1
    %s674 = scalar_lea.sflag [#allocation4], 1
    %675 = vsyncpa %s674, 1

</llo_original>
